<compile_context>
chip_gen: v7x
topology: tpu7x:2x2x1
jax: 0.10.0
libtpu: 0.0.40
codegen_flags: <defaults>
</compile_context>

<pallas_src>
import functools

import jax
import jax.numpy as jnp
from jax import lax
from jax.experimental import pallas as pl
from jax.experimental.pallas import tpu as pltpu


TAU = 0.1          # temperature of the contrastive term
DISTILL_W = 0.5    # weight of the cross-task (memory) distillation term


def _osiris_loss_kernel(xs_ref, zp1_ref, zp2_ref, mem_ref, vrow_ref, vcol_ref,
                        wb_ref, bb_ref, wp1_ref, bp1_ref, wp2_ref, bp2_ref,
                        loss_ref, *, n_pad):
    """Loss of the synthetic `net` over one mixed (current + memory) batch.

    xs_ref holds both augmented views stacked along rows: (2*n_pad, F), bf16.
    """
    # ---- fused encoder: one backbone + projector chain over both views ----
    x = xs_ref[...]                                                     # bf16
    h = jnp.dot(x, wb_ref[...], preferred_element_type=jnp.float32) + bb_ref[...]
    h = jnp.maximum(h, 0.0).astype(jnp.bfloat16)
    h = jnp.dot(h, wp1_ref[...], preferred_element_type=jnp.float32) + bp1_ref[...]
    h = jnp.maximum(h, 0.0).astype(jnp.bfloat16)
    z = jnp.dot(h, wp2_ref[...], preferred_element_type=jnp.float32) + bp2_ref[...]
    z = z * lax.rsqrt(jnp.sum(z * z, axis=-1, keepdims=True) + 1e-12)    # f32

    z1 = z[:n_pad]                                                       # (N, P)
    z2 = z[n_pad:]                                                       # (N, P)

    vrow = vrow_ref[...]                                                 # (N, 1)
    vcol = vcol_ref[...]                                                 # (1, N)
    n_valid = jnp.maximum(jnp.sum(vrow), 1.0)
    # 0 for valid columns, -1e9 for pad columns (drops them from the softmax).
    col_bias = (vcol - 1.0) * 1e9

    inv_tau = 1.0 / TAU
    # Positive logits directly from the row-wise dot product (no diag mask).
    pos = jnp.sum(z1 * z2, axis=-1, keepdims=True) * inv_tau             # (N, 1)

    # Both InfoNCE directions as row-wise LSE over an MXU-produced (N, N) tile;
    # the transposed direction is a second matmul rather than axis-0 reductions.
    sim12 = lax.dot_general(z1, z2, (((1,), (1,)), ((), ())),
                            preferred_element_type=jnp.float32) * inv_tau + col_bias
    sim21 = lax.dot_general(z2, z1, (((1,), (1,)), ((), ())),
                            preferred_element_type=jnp.float32) * inv_tau + col_bias

    def row_lse(s):
        m = jnp.max(s, axis=-1, keepdims=True)
        return jnp.log(jnp.sum(jnp.exp(s - m), axis=-1, keepdims=True)) + m

    loss_12 = jnp.sum((row_lse(sim12) - pos) * vrow) / n_valid
    loss_21 = jnp.sum((row_lse(sim21) - pos) * vrow) / n_valid
    loss_contrast = 0.5 * (loss_12 + loss_21)

    # Cross-task distillation: only memory rows count; zp* are pre-normalized
    # detached features (pad / current rows are zero and carry mem == 0).
    mem = mem_ref[...]                                                   # (N, 1)
    n_mem = jnp.maximum(jnp.sum(mem), 1.0)
    d1 = jnp.sum((z1 - zp1_ref[...]) ** 2, axis=-1, keepdims=True)
    d2 = jnp.sum((z2 - zp2_ref[...]) ** 2, axis=-1, keepdims=True)
    loss_distill = jnp.sum((d1 + d2) * mem) / (2.0 * n_mem)

    total = loss_contrast + DISTILL_W * loss_distill
    loss_ref[...] = jnp.reshape(total, (1, 1))


def _l2_normalize(z):
    return z * lax.rsqrt(jnp.sum(z * z, axis=-1, keepdims=True) + 1e-12)


def net_loss_pallas(xs, zp1n, zp2n, mem, vrow, vcol, params, n_pad):
    """Grid-less pallas_call: everything lives in VMEM as a single block."""
    args = (xs, zp1n, zp2n, mem, vrow, vcol,
            params["wb"].astype(jnp.bfloat16), params["bb"],
            params["wp1"].astype(jnp.bfloat16), params["bp1"],
            params["wp2"].astype(jnp.bfloat16), params["bp2"])

    vmem = pl.BlockSpec(memory_space=pltpu.MemorySpace.VMEM)
    return pl.pallas_call(
        functools.partial(_osiris_loss_kernel, n_pad=n_pad),
        in_specs=[vmem] * len(args),
        out_specs=pl.BlockSpec(memory_space=pltpu.MemorySpace.VMEM),
        out_shape=jax.ShapeDtypeStruct((1, 1), jnp.float32),
    )(*args)


def continual_model_forward(aug_x1, aug_x2, buf_x1, buf_x2, z1_prev, z2_prev,
                            buf_task_labels, params, task):
    """JAX glue that mirrors ContinualModel.forward / recall / select."""
    B = aug_x1.shape[0]
    PROJ = params["wp2"].shape[1]

    if task > 0:
        # select(): concat current batch with replay-buffer samples.
        mixed_x1 = jnp.concatenate([aug_x1, buf_x1], axis=0)
        mixed_x2 = jnp.concatenate([aug_x2, buf_x2], axis=0)
        K = buf_x1.shape[0]
        mem_idx = jnp.concatenate(
            [jnp.zeros((B,), jnp.float32), jnp.ones((K,), jnp.float32)])
        task_labels = jnp.concatenate(
            [jnp.full((B,), task, jnp.int32), buf_task_labels.astype(jnp.int32)])
        # stored (detached) features from the buffer; pad current rows so they
        # align with the mixed batch (masked out inside the kernel).
        zp1 = jnp.concatenate([jnp.zeros((B, PROJ), jnp.float32), z1_prev], axis=0)
        zp2 = jnp.concatenate([jnp.zeros((B, PROJ), jnp.float32), z2_prev], axis=0)
    else:
        mixed_x1, mixed_x2 = aug_x1, aug_x2
        mem_idx = jnp.zeros((B,), jnp.float32)
        task_labels = jnp.full((B,), task, jnp.int32)
        zp1 = jnp.zeros((B, PROJ), jnp.float32)
        zp2 = jnp.zeros((B, PROJ), jnp.float32)

    N = mixed_x1.shape[0]
    x1f = mixed_x1.reshape(N, -1).astype(jnp.float32)
    x2f = mixed_x2.reshape(N, -1).astype(jnp.float32)

    # Pad the mixed batch to a sublane multiple (8).  At realistic batch sizes
    # pad to 128 instead so the (N, N) similarity tile is lane-dense.
    n_pad = max(8, pl.cdiv(N, 8) * 8)
    pad = n_pad - N
    if pad:
        x1f = jnp.pad(x1f, ((0, pad), (0, 0)))
        x2f = jnp.pad(x2f, ((0, pad), (0, 0)))
        zp1 = jnp.pad(zp1, ((0, pad), (0, 0)))
        zp2 = jnp.pad(zp2, ((0, pad), (0, 0)))
        mem_idx = jnp.pad(mem_idx, (0, pad))
    valid = (jnp.arange(n_pad) < N).astype(jnp.float32)

    # One fused two-view operand (bf16) for a single encoder pass in-kernel.
    xs = jnp.concatenate([x1f, x2f], axis=0).astype(jnp.bfloat16)   # (2*n_pad, F)
    # Detached previous features are constants w.r.t. the hot path: normalize here.
    zp1n = _l2_normalize(zp1)
    zp2n = _l2_normalize(zp2)

    mem = mem_idx.reshape(n_pad, 1)
    vrow = valid.reshape(n_pad, 1)
    vcol = valid.reshape(1, n_pad)

    # TODO(synk): task_labels are forwarded to `net` in the reference, but the
    # synthetic net here only consumes the memory mask; concat_all_gather and
    # Buffer.add_data are distributed / stateful side effects, not compute.
    del task_labels

    return net_loss_pallas(xs, zp1n, zp2n, mem, vrow, vcol, params, n_pad)


if __name__ == "__main__":
    key = jax.random.PRNGKey(0)

    # small shapes consistent with the module's forward
    B, C, H, W = 8, 4, 8, 8        # current augmented batch, NCHW
    p = 0.5
    task = 1
    per_gpu_k = int(B * (1 - p))   # replay samples (world_size=1, rank=0) -> 4
    F = C * H * W                  # 256 flattened features
    HID, PROJ = 128, 128

    ks = jax.random.split(key, 9)
    aug_x1 = jax.random.normal(ks[0], (B, C, H, W), jnp.float32)
    aug_x2 = jax.random.normal(ks[1], (B, C, H, W), jnp.float32)
    buf_x1 = jax.random.normal(ks[2], (per_gpu_k, C, H, W), jnp.float32)
    buf_x2 = jax.random.normal(ks[3], (per_gpu_k, C, H, W), jnp.float32)
    z1_prev = jax.random.normal(ks[4], (per_gpu_k, PROJ), jnp.float32)
    z2_prev = jax.random.normal(ks[5], (per_gpu_k, PROJ), jnp.float32)
    buf_task_labels = jnp.zeros((per_gpu_k,), jnp.int32)

    # deterministic synthetic parameters for the net (backbone + projector)
    params = dict(
        wb=0.05 * jax.random.normal(ks[6], (F, HID), jnp.float32),
        bb=jnp.zeros((1, HID), jnp.float32),
        wp1=0.05 * jax.random.normal(ks[7], (HID, HID), jnp.float32),
        bp1=jnp.zeros((1, HID), jnp.float32),
        wp2=0.05 * jax.random.normal(ks[8], (HID, PROJ), jnp.float32),
        bp2=jnp.zeros((1, PROJ), jnp.float32),
    )

    loss = continual_model_forward(aug_x1, aug_x2, buf_x1, buf_x2,
                                   z1_prev, z2_prev, buf_task_labels,
                                   params, task=task)
    jax.block_until_ready(loss)
    assert loss.shape == (1, 1) and jnp.isfinite(loss).all()
    print("KERNEL_OK")
</pallas_src>

<mosaic_0001>
module attributes {stable_mosaic.version = 11 : i64} {
  func.func @_osiris_loss_kernel(%arg0: memref<32x256xbf16, #tpu.memory_space<vmem>>, %arg1: memref<16x128xf32, #tpu.memory_space<vmem>>, %arg2: memref<16x128xf32, #tpu.memory_space<vmem>>, %arg3: memref<16x1xf32, #tpu.memory_space<vmem>>, %arg4: memref<16x1xf32, #tpu.memory_space<vmem>>, %arg5: memref<1x16xf32, #tpu.memory_space<vmem>>, %arg6: memref<256x128xbf16, #tpu.memory_space<vmem>>, %arg7: memref<1x128xf32, #tpu.memory_space<vmem>>, %arg8: memref<128x128xbf16, #tpu.memory_space<vmem>>, %arg9: memref<1x128xf32, #tpu.memory_space<vmem>>, %arg10: memref<128x128xbf16, #tpu.memory_space<vmem>>, %arg11: memref<1x128xf32, #tpu.memory_space<vmem>>, %arg12: memref<1x1xf32, #tpu.memory_space<vmem>>) attributes {dimension_semantics = [], scalar_prefetch = 0 : i64, scratch_operands = 0 : i64, tpu.core_type = #tpu.core_type<tc>} {
    %c0 = arith.constant 0 : index
    %c0_0 = arith.constant 0 : index
    %0 = vector.load %arg0[%c0, %c0_0] : memref<32x256xbf16, #tpu.memory_space<vmem>>, vector<32x256xbf16>
    %c0_1 = arith.constant 0 : index
    %c0_2 = arith.constant 0 : index
    %1 = vector.load %arg6[%c0_1, %c0_2] : memref<256x128xbf16, #tpu.memory_space<vmem>>, vector<256x128xbf16>
    %cst = arith.constant dense<0.000000e+00> : vector<32x128xf32>
    %2 = tpu.matmul %0, %1, %cst {dimension_numbers = #tpu.dot_dimension_numbers<[1], [0], [0], [1], [0, 0, 1, 1], [], []>} : vector<32x256xbf16>, vector<256x128xbf16>, vector<32x128xf32> -> vector<32x128xf32>
    %c0_3 = arith.constant 0 : index
    %c0_4 = arith.constant 0 : index
    %3 = vector.load %arg7[%c0_3, %c0_4] : memref<1x128xf32, #tpu.memory_space<vmem>>, vector<1x128xf32>
    %4 = vector.broadcast %3 : vector<1x128xf32> to vector<32x128xf32>
    %5 = arith.addf %2, %4 : vector<32x128xf32>
    %cst_5 = arith.constant 0.000000e+00 : f32
    %6 = vector.broadcast %cst_5 : f32 to vector<32x128xf32>
    %7 = arith.maximumf %5, %6 : vector<32x128xf32>
    %8 = arith.truncf %7 : vector<32x128xf32> to vector<32x128xbf16>
    %c0_6 = arith.constant 0 : index
    %c0_7 = arith.constant 0 : index
    %9 = vector.load %arg8[%c0_6, %c0_7] : memref<128x128xbf16, #tpu.memory_space<vmem>>, vector<128x128xbf16>
    %cst_8 = arith.constant dense<0.000000e+00> : vector<32x128xf32>
    %10 = tpu.matmul %8, %9, %cst_8 {dimension_numbers = #tpu.dot_dimension_numbers<[1], [0], [0], [1], [0, 0, 1, 1], [], []>} : vector<32x128xbf16>, vector<128x128xbf16>, vector<32x128xf32> -> vector<32x128xf32>
    %c0_9 = arith.constant 0 : index
    %c0_10 = arith.constant 0 : index
    %11 = vector.load %arg9[%c0_9, %c0_10] : memref<1x128xf32, #tpu.memory_space<vmem>>, vector<1x128xf32>
    %12 = vector.broadcast %11 : vector<1x128xf32> to vector<32x128xf32>
    %13 = arith.addf %10, %12 : vector<32x128xf32>
    %cst_11 = arith.constant 0.000000e+00 : f32
    %14 = vector.broadcast %cst_11 : f32 to vector<32x128xf32>
    %15 = arith.maximumf %13, %14 : vector<32x128xf32>
    %16 = arith.truncf %15 : vector<32x128xf32> to vector<32x128xbf16>
    %c0_12 = arith.constant 0 : index
    %c0_13 = arith.constant 0 : index
    %17 = vector.load %arg10[%c0_12, %c0_13] : memref<128x128xbf16, #tpu.memory_space<vmem>>, vector<128x128xbf16>
    %cst_14 = arith.constant dense<0.000000e+00> : vector<32x128xf32>
    %18 = tpu.matmul %16, %17, %cst_14 {dimension_numbers = #tpu.dot_dimension_numbers<[1], [0], [0], [1], [0, 0, 1, 1], [], []>} : vector<32x128xbf16>, vector<128x128xbf16>, vector<32x128xf32> -> vector<32x128xf32>
    %c0_15 = arith.constant 0 : index
    %c0_16 = arith.constant 0 : index
    %19 = vector.load %arg11[%c0_15, %c0_16] : memref<1x128xf32, #tpu.memory_space<vmem>>, vector<1x128xf32>
    %20 = vector.broadcast %19 : vector<1x128xf32> to vector<32x128xf32>
    %21 = arith.addf %18, %20 : vector<32x128xf32>
    %22 = arith.mulf %21, %21 : vector<32x128xf32>
    %cst_17 = arith.constant dense<0.000000e+00> : vector<32xf32>
    %23 = vector.multi_reduction <add>, %22, %cst_17 [1] : vector<32x128xf32> to vector<32xf32>
    %24 = vector.shape_cast %23 : vector<32xf32> to vector<32x1xf32>
    %cst_18 = arith.constant 9.99999996E-13 : f32
    %25 = vector.broadcast %cst_18 : f32 to vector<32x1xf32>
    %26 = arith.addf %24, %25 : vector<32x1xf32>
    %27 = math.rsqrt %26 : vector<32x1xf32>
    %28 = vector.broadcast %27 : vector<32x1xf32> to vector<32x128xf32>
    %29 = arith.mulf %21, %28 : vector<32x128xf32>
    %30 = vector.extract_strided_slice %29 {offsets = [0, 0], sizes = [16, 128], strides = [1, 1]} : vector<32x128xf32> to vector<16x128xf32>
    %31 = vector.extract_strided_slice %29 {offsets = [16, 0], sizes = [16, 128], strides = [1, 1]} : vector<32x128xf32> to vector<16x128xf32>
    %c0_19 = arith.constant 0 : index
    %c0_20 = arith.constant 0 : index
    %32 = vector.load %arg4[%c0_19, %c0_20] : memref<16x1xf32, #tpu.memory_space<vmem>>, vector<16x1xf32>
    %c0_21 = arith.constant 0 : index
    %c0_22 = arith.constant 0 : index
    %33 = vector.load %arg5[%c0_21, %c0_22] : memref<1x16xf32, #tpu.memory_space<vmem>>, vector<1x16xf32>
    %34 = vector.shape_cast %32 : vector<16x1xf32> to vector<1x16x1xf32>
    %cst_23 = arith.constant dense<0.000000e+00> : vector<1xf32>
    %35 = vector.multi_reduction <add>, %34, %cst_23 [1, 2] : vector<1x16x1xf32> to vector<1xf32>
    %36 = vector.shape_cast %35 : vector<1xf32> to vector<1x1x1xf32>
    %37 = vector.extract %36[0, 0, 0] : f32 from vector<1x1x1xf32>
    %cst_24 = arith.constant 1.000000e+00 : f32
    %38 = arith.maximumf %37, %cst_24 : f32
    %cst_25 = arith.constant 1.000000e+00 : f32
    %39 = vector.broadcast %cst_25 : f32 to vector<1x16xf32>
    %40 = arith.subf %33, %39 : vector<1x16xf32>
    %cst_26 = arith.constant 1.000000e+09 : f32
    %41 = vector.broadcast %cst_26 : f32 to vector<1x16xf32>
    %42 = arith.mulf %40, %41 : vector<1x16xf32>
    %43 = arith.mulf %30, %31 : vector<16x128xf32>
    %cst_27 = arith.constant dense<0.000000e+00> : vector<16xf32>
    %44 = vector.multi_reduction <add>, %43, %cst_27 [1] : vector<16x128xf32> to vector<16xf32>
    %45 = vector.shape_cast %44 : vector<16xf32> to vector<16x1xf32>
    %cst_28 = arith.constant 1.000000e+01 : f32
    %46 = vector.broadcast %cst_28 : f32 to vector<16x1xf32>
    %47 = arith.mulf %45, %46 : vector<16x1xf32>
    %cst_29 = arith.constant dense<0.000000e+00> : vector<16x16xf32>
    %48 = tpu.matmul %30, %31, %cst_29 {dimension_numbers = #tpu.dot_dimension_numbers<[1], [1], [0], [0], [0, 0, 1, 0], [], []>} : vector<16x128xf32>, vector<16x128xf32>, vector<16x16xf32> -> vector<16x16xf32>
    %cst_30 = arith.constant 1.000000e+01 : f32
    %49 = vector.broadcast %cst_30 : f32 to vector<16x16xf32>
    %50 = arith.mulf %48, %49 : vector<16x16xf32>
    %51 = vector.broadcast %42 : vector<1x16xf32> to vector<16x16xf32>
    %52 = arith.addf %50, %51 : vector<16x16xf32>
    %cst_31 = arith.constant dense<0.000000e+00> : vector<16x16xf32>
    %53 = tpu.matmul %31, %30, %cst_31 {dimension_numbers = #tpu.dot_dimension_numbers<[1], [1], [0], [0], [0, 0, 1, 0], [], []>} : vector<16x128xf32>, vector<16x128xf32>, vector<16x16xf32> -> vector<16x16xf32>
    %cst_32 = arith.constant 1.000000e+01 : f32
    %54 = vector.broadcast %cst_32 : f32 to vector<16x16xf32>
    %55 = arith.mulf %53, %54 : vector<16x16xf32>
    %56 = vector.broadcast %42 : vector<1x16xf32> to vector<16x16xf32>
    %57 = arith.addf %55, %56 : vector<16x16xf32>
    %cst_33 = arith.constant dense<0xFF800000> : vector<16xf32>
    %58 = vector.multi_reduction <maximumf>, %52, %cst_33 [1] : vector<16x16xf32> to vector<16xf32>
    %59 = vector.shape_cast %58 : vector<16xf32> to vector<16x1xf32>
    %60 = vector.broadcast %59 : vector<16x1xf32> to vector<16x16xf32>
    %61 = arith.subf %52, %60 : vector<16x16xf32>
    %62 = math.exp %61 : vector<16x16xf32>
    %cst_34 = arith.constant dense<0.000000e+00> : vector<16xf32>
    %63 = vector.multi_reduction <add>, %62, %cst_34 [1] : vector<16x16xf32> to vector<16xf32>
    %64 = vector.shape_cast %63 : vector<16xf32> to vector<16x1xf32>
    %65 = math.log %64 : vector<16x1xf32>
    %66 = arith.addf %65, %59 : vector<16x1xf32>
    %67 = arith.subf %66, %47 : vector<16x1xf32>
    %68 = arith.mulf %67, %32 : vector<16x1xf32>
    %69 = vector.shape_cast %68 : vector<16x1xf32> to vector<1x16x1xf32>
    %cst_35 = arith.constant dense<0.000000e+00> : vector<1xf32>
    %70 = vector.multi_reduction <add>, %69, %cst_35 [1, 2] : vector<1x16x1xf32> to vector<1xf32>
    %71 = vector.shape_cast %70 : vector<1xf32> to vector<1x1x1xf32>
    %72 = vector.extract %71[0, 0, 0] : f32 from vector<1x1x1xf32>
    %73 = arith.divf %72, %38 : f32
    %cst_36 = arith.constant dense<0xFF800000> : vector<16xf32>
    %74 = vector.multi_reduction <maximumf>, %57, %cst_36 [1] : vector<16x16xf32> to vector<16xf32>
    %75 = vector.shape_cast %74 : vector<16xf32> to vector<16x1xf32>
    %76 = vector.broadcast %75 : vector<16x1xf32> to vector<16x16xf32>
    %77 = arith.subf %57, %76 : vector<16x16xf32>
    %78 = math.exp %77 : vector<16x16xf32>
    %cst_37 = arith.constant dense<0.000000e+00> : vector<16xf32>
    %79 = vector.multi_reduction <add>, %78, %cst_37 [1] : vector<16x16xf32> to vector<16xf32>
    %80 = vector.shape_cast %79 : vector<16xf32> to vector<16x1xf32>
    %81 = math.log %80 : vector<16x1xf32>
    %82 = arith.addf %81, %75 : vector<16x1xf32>
    %83 = arith.subf %82, %47 : vector<16x1xf32>
    %84 = arith.mulf %83, %32 : vector<16x1xf32>
    %85 = vector.shape_cast %84 : vector<16x1xf32> to vector<1x16x1xf32>
    %cst_38 = arith.constant dense<0.000000e+00> : vector<1xf32>
    %86 = vector.multi_reduction <add>, %85, %cst_38 [1, 2] : vector<1x16x1xf32> to vector<1xf32>
    %87 = vector.shape_cast %86 : vector<1xf32> to vector<1x1x1xf32>
    %88 = vector.extract %87[0, 0, 0] : f32 from vector<1x1x1xf32>
    %89 = arith.divf %88, %38 : f32
    %90 = arith.addf %73, %89 : f32
    %cst_39 = arith.constant 5.000000e-01 : f32
    %91 = arith.mulf %cst_39, %90 : f32
    %c0_40 = arith.constant 0 : index
    %c0_41 = arith.constant 0 : index
    %92 = vector.load %arg3[%c0_40, %c0_41] : memref<16x1xf32, #tpu.memory_space<vmem>>, vector<16x1xf32>
    %93 = vector.shape_cast %92 : vector<16x1xf32> to vector<1x16x1xf32>
    %cst_42 = arith.constant dense<0.000000e+00> : vector<1xf32>
    %94 = vector.multi_reduction <add>, %93, %cst_42 [1, 2] : vector<1x16x1xf32> to vector<1xf32>
    %95 = vector.shape_cast %94 : vector<1xf32> to vector<1x1x1xf32>
    %96 = vector.extract %95[0, 0, 0] : f32 from vector<1x1x1xf32>
    %cst_43 = arith.constant 1.000000e+00 : f32
    %97 = arith.maximumf %96, %cst_43 : f32
    %c0_44 = arith.constant 0 : index
    %c0_45 = arith.constant 0 : index
    %98 = vector.load %arg1[%c0_44, %c0_45] : memref<16x128xf32, #tpu.memory_space<vmem>>, vector<16x128xf32>
    %99 = arith.subf %30, %98 : vector<16x128xf32>
    %100 = arith.mulf %99, %99 : vector<16x128xf32>
    %cst_46 = arith.constant dense<0.000000e+00> : vector<16xf32>
    %101 = vector.multi_reduction <add>, %100, %cst_46 [1] : vector<16x128xf32> to vector<16xf32>
    %102 = vector.shape_cast %101 : vector<16xf32> to vector<16x1xf32>
    %c0_47 = arith.constant 0 : index
    %c0_48 = arith.constant 0 : index
    %103 = vector.load %arg2[%c0_47, %c0_48] : memref<16x128xf32, #tpu.memory_space<vmem>>, vector<16x128xf32>
    %104 = arith.subf %31, %103 : vector<16x128xf32>
    %105 = arith.mulf %104, %104 : vector<16x128xf32>
    %cst_49 = arith.constant dense<0.000000e+00> : vector<16xf32>
    %106 = vector.multi_reduction <add>, %105, %cst_49 [1] : vector<16x128xf32> to vector<16xf32>
    %107 = vector.shape_cast %106 : vector<16xf32> to vector<16x1xf32>
    %108 = arith.addf %102, %107 : vector<16x1xf32>
    %109 = arith.mulf %108, %92 : vector<16x1xf32>
    %110 = vector.shape_cast %109 : vector<16x1xf32> to vector<1x16x1xf32>
    %cst_50 = arith.constant dense<0.000000e+00> : vector<1xf32>
    %111 = vector.multi_reduction <add>, %110, %cst_50 [1, 2] : vector<1x16x1xf32> to vector<1xf32>
    %112 = vector.shape_cast %111 : vector<1xf32> to vector<1x1x1xf32>
    %113 = vector.extract %112[0, 0, 0] : f32 from vector<1x1x1xf32>
    %cst_51 = arith.constant 2.000000e+00 : f32
    %114 = arith.mulf %cst_51, %97 : f32
    %115 = arith.divf %113, %114 : f32
    %cst_52 = arith.constant 5.000000e-01 : f32
    %116 = arith.mulf %cst_52, %115 : f32
    %117 = arith.addf %91, %116 : f32
    %118 = vector.broadcast %117 : f32 to vector<1x1xf32>
    %c0_53 = arith.constant 0 : index
    %c0_54 = arith.constant 0 : index
    %119 = vector.load %arg12[%c0_53, %c0_54] : memref<1x1xf32, #tpu.memory_space<vmem>>, vector<1x1xf32>
    tpu.vector_store %arg12[%c0_53, %c0_54], %118 {strides = array<i32>} : memref<1x1xf32, #tpu.memory_space<vmem>>, vector<1x1xf32>,
    return
  }
}

</mosaic_0001>

<llo_original>
// kernel: tpu_custom_call.1
$region0: #{tpu_custom_call.1}
  #allocation0 [shape = 'u32[]', space=smem, size = 0x4, offset = 0x4, fixed_abs, tag = 'smem constant byte address 0x4 - core index']
  #allocation1 [shape = 'u32[144,128]{1,0:T(1,128)}', space=vmem, size = 0x12000, scoped, tag = 'internal scratch']
  %s0 = inlined_call_operand.hbm [shape: bf16[32,256], index: 0, kind: input, shape index: {}]
  %s1 = inlined_call_operand.hbm [shape: f32[16,128], index: 1, kind: input, shape index: {}]
  %s2 = inlined_call_operand.hbm [shape: f32[16,128], index: 2, kind: input, shape index: {}]
  %s3 = inlined_call_operand.vmem [shape: f32[16,1], index: 3, kind: input, shape index: {}]
  %s4 = inlined_call_operand.vmem [shape: f32[16,1], index: 4, kind: input, shape index: {}]
  %s5 = inlined_call_operand.hbm [shape: f32[1,16], index: 5, kind: input, shape index: {}]
  %s6 = inlined_call_operand.hbm [shape: bf16[256,128], index: 6, kind: input, shape index: {}]
  %s7 = inlined_call_operand.hbm [shape: f32[1,128], index: 7, kind: input, shape index: {}]
  %s8 = inlined_call_operand.vmem [shape: bf16[128,128], index: 8, kind: input, shape index: {}]
  %s9 = inlined_call_operand.vmem [shape: f32[1,128], index: 9, kind: input, shape index: {}]
  %s10 = inlined_call_operand.hbm [shape: bf16[128,128], index: 10, kind: input, shape index: {}]
  %s11 = inlined_call_operand.vmem [shape: f32[1,128], index: 11, kind: input, shape index: {}]
  %s12 = inlined_call_operand.hbm [shape: f32[1,1], index: 12, kind: output, shape index: {}]
  %s13 = sld [smem:[#allocation0]]
  $region86: #{tpu_custom_call.1} parent=0
    _
  %s15 = ssub.s32 1, %s13
  %s16 = scalar_select 0, %s15, %s13
  $region1: #{tpu_custom_call.1} parent=0
    #allocation2 [shape = 'u8[16384]{0}', space=vmem, size = 0x4000, scoped, tag = 'input window, operand 0, single buffered']
    #allocation3 [shape = 's32[1]{0}', space=sflag, size = 0x4, scoped, tag = 'scoped memory for tpu_custom_call.1']
    #allocation4 [shape = 's32[1]{0}', space=sflag, size = 0x4, scoped, tag = 'scoped memory for tpu_custom_call.1']
    #allocation5 [shape = 'u8[8192]{0}', space=vmem, size = 0x2000, scoped, tag = 'input window, operand 1, single buffered']
    #allocation6 [shape = 's32[1]{0}', space=sflag, size = 0x4, scoped, tag = 'scoped memory for tpu_custom_call.1']
    #allocation7 [shape = 'u8[8192]{0}', space=vmem, size = 0x2000, scoped, tag = 'input window, operand 2, single buffered']
    #allocation8 [shape = 'u8[512]{0}', space=vmem, size = 0x400, scoped, tag = 'input window, operand 5, single buffered']
    #allocation9 [shape = 's32[1]{0}', space=sflag, size = 0x4, scoped, tag = 'scoped memory for tpu_custom_call.1']
    #allocation10 [shape = 'u8[65536]{0}', space=vmem, size = 0x10000, scoped, tag = 'input window, operand 6, single buffered']
    #allocation11 [shape = 'u8[512]{0}', space=vmem, size = 0x400, scoped, tag = 'input window, operand 7, single buffered']
    #allocation12 [shape = 's32[1]{0}', space=sflag, size = 0x4, scoped, tag = 'scoped memory for tpu_custom_call.1']
    #allocation13 [shape = 'u8[32768]{0}', space=vmem, size = 0x8000, scoped, tag = 'input window, operand 10, single buffered']
    #allocation14 [shape = 'u8[512]{0}', space=vmem, size = 0x400, scoped, tag = 'output window, operand 0, single buffered']
    %17 = vsyncpa [#allocation3], 0
    %18 = vsyncpa [#allocation6], 0
    %19 = vsyncpa [#allocation9], 0
    %20 = vsyncpa [#allocation12], 0
    %21 = vsyncpa [#allocation4], 0
    // Predicated region
    $region2: #{tpu_custom_call.1} parent=1 // pred_check
      _
    $region3: #{tpu_custom_call.1} parent=1 // pred_check_branch
      %23 = sbr.rel (0) target = $region5
    $region4: #{tpu_custom_call.1} parent=1 // pred_region
      %s25 = ssub.s32 512, 512
      %26 = vsyncadd [#allocation3], %s25
      %s27 = sshll.u32 [#allocation2], 4
      %s28 = int_to_ptr.vmem [resolvable:$true] %s27
      %33 = dma.hbm_to_vmem [thread:$0]  %s0, 512, %s28, [#allocation3], 128, 128, 8
    $region5: #{tpu_custom_call.1} parent=1 // pred_fallthru
      _
    // Predicated region
    $region6: #{tpu_custom_call.1} parent=1 // pred_check
      _
    $region7: #{tpu_custom_call.1} parent=1 // pred_check_branch
      %35 = sbr.rel (0) target = $region9
    $region8: #{tpu_custom_call.1} parent=1 // pred_region
      %s37 = ssub.s32 256, 256
      %38 = vsyncadd [#allocation6], %s37
      %s39 = sshll.u32 [#allocation5], 4
      %s40 = int_to_ptr.vmem [resolvable:$true] %s39
      %45 = dma.hbm_to_vmem [thread:$0]  %s1, 256, %s40, [#allocation6], 128, 128, 8
    $region9: #{tpu_custom_call.1} parent=1 // pred_fallthru
      _
    // Predicated region
    $region10: #{tpu_custom_call.1} parent=1 // pred_check
      _
    $region11: #{tpu_custom_call.1} parent=1 // pred_check_branch
      %47 = sbr.rel (0) target = $region13
    $region12: #{tpu_custom_call.1} parent=1 // pred_region
      %s49 = ssub.s32 256, 256
      %50 = vsyncadd [#allocation6], %s49
      %s51 = sshll.u32 [#allocation7], 4
      %s52 = int_to_ptr.vmem [resolvable:$true] %s51
      %57 = dma.hbm_to_vmem [thread:$0]  %s2, 256, %s52, [#allocation6], 128, 128, 8
    $region13: #{tpu_custom_call.1} parent=1 // pred_fallthru
      _
    // Predicated region
    $region14: #{tpu_custom_call.1} parent=1 // pred_check
      _
    $region15: #{tpu_custom_call.1} parent=1 // pred_check_branch
      %59 = sbr.rel (0) target = $region17
    $region16: #{tpu_custom_call.1} parent=1 // pred_region
      _
    $region17: #{tpu_custom_call.1} parent=1 // pred_fallthru
      _
    // Predicated region
    $region18: #{tpu_custom_call.1} parent=1 // pred_check
      _
    $region19: #{tpu_custom_call.1} parent=1 // pred_check_branch
      %61 = sbr.rel (0) target = $region21
    $region20: #{tpu_custom_call.1} parent=1 // pred_region
      _
    $region21: #{tpu_custom_call.1} parent=1 // pred_fallthru
      _
    // Predicated region
    $region22: #{tpu_custom_call.1} parent=1 // pred_check
      _
    $region23: #{tpu_custom_call.1} parent=1 // pred_check_branch
      %63 = sbr.rel (0) target = $region25
    $region24: #{tpu_custom_call.1} parent=1 // pred_region
      %s65 = ssub.s32 16, 16
      %66 = vsyncadd [#allocation9], %s65
      %s68 = sshll.u32 [#allocation8], 4
      %s69 = int_to_ptr.vmem [resolvable:$true] %s68
      %71 = dma.hbm_to_vmem [thread:$0]  %s5, 16, %s69, [#allocation9]
    $region25: #{tpu_custom_call.1} parent=1 // pred_fallthru
      _
    // Predicated region
    $region26: #{tpu_custom_call.1} parent=1 // pred_check
      _
    $region27: #{tpu_custom_call.1} parent=1 // pred_check_branch
      %73 = sbr.rel (0) target = $region29
    $region28: #{tpu_custom_call.1} parent=1 // pred_region
      %s75 = ssub.s32 2048, 2048
      %76 = vsyncadd [#allocation9], %s75
      %s77 = sshll.u32 [#allocation10], 4
      %s78 = int_to_ptr.vmem [resolvable:$true] %s77
      %83 = dma.hbm_to_vmem [thread:$0]  %s6, 2048, %s78, [#allocation9], 64, 64, 4
    $region29: #{tpu_custom_call.1} parent=1 // pred_fallthru
      _
    // Predicated region
    $region30: #{tpu_custom_call.1} parent=1 // pred_check
      _
    $region31: #{tpu_custom_call.1} parent=1 // pred_check_branch
      %85 = sbr.rel (0) target = $region33
    $region32: #{tpu_custom_call.1} parent=1 // pred_region
      %s87 = ssub.s32 16, 16
      %88 = vsyncadd [#allocation12], %s87
      %s90 = sshll.u32 [#allocation11], 4
      %s91 = int_to_ptr.vmem [resolvable:$true] %s90
      %93 = dma.hbm_to_vmem [thread:$0]  %s7, 16, %s91, [#allocation12]
    $region33: #{tpu_custom_call.1} parent=1 // pred_fallthru
      _
    // Predicated region
    $region34: #{tpu_custom_call.1} parent=1 // pred_check
      _
    $region35: #{tpu_custom_call.1} parent=1 // pred_check_branch
      %95 = sbr.rel (0) target = $region37
    $region36: #{tpu_custom_call.1} parent=1 // pred_region
      _
    $region37: #{tpu_custom_call.1} parent=1 // pred_fallthru
      _
    // Predicated region
    $region38: #{tpu_custom_call.1} parent=1 // pred_check
      _
    $region39: #{tpu_custom_call.1} parent=1 // pred_check_branch
      %97 = sbr.rel (0) target = $region41
    $region40: #{tpu_custom_call.1} parent=1 // pred_region
      _
    $region41: #{tpu_custom_call.1} parent=1 // pred_fallthru
      _
    // Predicated region
    $region42: #{tpu_custom_call.1} parent=1 // pred_check
      _
    $region43: #{tpu_custom_call.1} parent=1 // pred_check_branch
      %99 = sbr.rel (0) target = $region45
    $region44: #{tpu_custom_call.1} parent=1 // pred_region
      %s101 = ssub.s32 1024, 1024
      %102 = vsyncadd [#allocation12], %s101
      %s103 = sshll.u32 [#allocation13], 4
      %s104 = int_to_ptr.vmem [resolvable:$true] %s103
      %109 = dma.hbm_to_vmem [thread:$0]  %s10, 1024, %s104, [#allocation12], 64, 64, 4
    $region45: #{tpu_custom_call.1} parent=1 // pred_fallthru
      _
    // Predicated region
    $region46: #{tpu_custom_call.1} parent=1 // pred_check
      _
    $region47: #{tpu_custom_call.1} parent=1 // pred_check_branch
      %111 = sbr.rel (0) target = $region49
    $region48: #{tpu_custom_call.1} parent=1 // pred_region
      _
    $region49: #{tpu_custom_call.1} parent=1 // pred_fallthru
      _
    // Predicated region
    $region50: #{tpu_custom_call.1} parent=1 // pred_check
      _
    $region51: #{tpu_custom_call.1} parent=1 // pred_check_branch
      %113 = sbr.rel (0) target = $region53
    $region52: #{tpu_custom_call.1} parent=1 // pred_region
      %114 = dma.done [#allocation3], 512
    $region53: #{tpu_custom_call.1} parent=1 // pred_fallthru
      _
    // Predicated region
    $region54: #{tpu_custom_call.1} parent=1 // pred_check
      _
    $region55: #{tpu_custom_call.1} parent=1 // pred_check_branch
      %116 = sbr.rel (0) target = $region57
    $region56: #{tpu_custom_call.1} parent=1 // pred_region
      %117 = dma.done [#allocation6], 256
    $region57: #{tpu_custom_call.1} parent=1 // pred_fallthru
      _
    // Predicated region
    $region58: #{tpu_custom_call.1} parent=1 // pred_check
      _
    $region59: #{tpu_custom_call.1} parent=1 // pred_check_branch
      %119 = sbr.rel (0) target = $region61
    $region60: #{tpu_custom_call.1} parent=1 // pred_region
      %120 = dma.done [#allocation6], 256
    $region61: #{tpu_custom_call.1} parent=1 // pred_fallthru
      _
    // Predicated region
    $region62: #{tpu_custom_call.1} parent=1 // pred_check
      _
    $region63: #{tpu_custom_call.1} parent=1 // pred_check_branch
      %122 = sbr.rel (0) target = $region65
    $region64: #{tpu_custom_call.1} parent=1 // pred_region
      %123 = dma.done [#allocation9], 16
    $region65: #{tpu_custom_call.1} parent=1 // pred_fallthru
      _
    // Predicated region
    $region66: #{tpu_custom_call.1} parent=1 // pred_check
      _
    $region67: #{tpu_custom_call.1} parent=1 // pred_check_branch
      %125 = sbr.rel (0) target = $region69
    $region68: #{tpu_custom_call.1} parent=1 // pred_region
      %126 = dma.done [#allocation9], 2048
    $region69: #{tpu_custom_call.1} parent=1 // pred_fallthru
      _
    // Predicated region
    $region70: #{tpu_custom_call.1} parent=1 // pred_check
      _
    $region71: #{tpu_custom_call.1} parent=1 // pred_check_branch
      %128 = sbr.rel (0) target = $region73
    $region72: #{tpu_custom_call.1} parent=1 // pred_region
      %129 = dma.done [#allocation12], 16
    $region73: #{tpu_custom_call.1} parent=1 // pred_fallthru
      _
    // Predicated region
    $region74: #{tpu_custom_call.1} parent=1 // pred_check
      _
    $region75: #{tpu_custom_call.1} parent=1 // pred_check_branch
      %131 = sbr.rel (0) target = $region77
    $region76: #{tpu_custom_call.1} parent=1 // pred_region
      %132 = dma.done [#allocation12], 1024
    $region77: #{tpu_custom_call.1} parent=1 // pred_fallthru
      _
    %v134 = vld [vmem:[#allocation2] sm:$0xff]
    %v135 = vld [vmem:[#allocation2 + $0x8] sm:$0xff]
    %v136 = vld [vmem:[#allocation2 + $0x10] sm:$0xff]
    %v137 = vld [vmem:[#allocation2 + $0x18] sm:$0xff]
    %v138 = vld [vmem:[#allocation10] sm:$0xf]
    %v139 = vld [vmem:[#allocation10 + $0x4] sm:$0xf]
    %v140 = vld [vmem:[#allocation10 + $0x8] sm:$0xf]
    %v141 = vld [vmem:[#allocation10 + $0xc] sm:$0xf]
    %v142 = vld [vmem:[#allocation10 + $0x10] sm:$0xf]
    %v143 = vld [vmem:[#allocation10 + $0x14] sm:$0xf]
    %v144 = vld [vmem:[#allocation10 + $0x18] sm:$0xf]
    %v145 = vld [vmem:[#allocation10 + $0x1c] sm:$0xf]
    %v146 = vld [vmem:[#allocation10 + $0x20] sm:$0xf]
    %v147 = vld [vmem:[#allocation10 + $0x24] sm:$0xf]
    %v148 = vld [vmem:[#allocation10 + $0x28] sm:$0xf]
    %v149 = vld [vmem:[#allocation10 + $0x2c] sm:$0xf]
    %v150 = vld [vmem:[#allocation10 + $0x30] sm:$0xf]
    %v151 = vld [vmem:[#allocation10 + $0x34] sm:$0xf]
    %v152 = vld [vmem:[#allocation10 + $0x38] sm:$0xf]
    %v153 = vld [vmem:[#allocation10 + $0x3c] sm:$0xf]
    %v154 = vld [vmem:[#allocation10 + $0x40] sm:$0xf]
    %v155 = vld [vmem:[#allocation10 + $0x44] sm:$0xf]
    %v156 = vld [vmem:[#allocation10 + $0x48] sm:$0xf]
    %v157 = vld [vmem:[#allocation10 + $0x4c] sm:$0xf]
    %v158 = vld [vmem:[#allocation10 + $0x50] sm:$0xf]
    %v159 = vld [vmem:[#allocation10 + $0x54] sm:$0xf]
    %v160 = vld [vmem:[#allocation10 + $0x58] sm:$0xf]
    %v161 = vld [vmem:[#allocation10 + $0x5c] sm:$0xf]
    %v162 = vld [vmem:[#allocation10 + $0x60] sm:$0xf]
    %v163 = vld [vmem:[#allocation10 + $0x64] sm:$0xf]
    %v164 = vld [vmem:[#allocation10 + $0x68] sm:$0xf]
    %v165 = vld [vmem:[#allocation10 + $0x6c] sm:$0xf]
    %v166 = vld [vmem:[#allocation10 + $0x70] sm:$0xf]
    %v167 = vld [vmem:[#allocation10 + $0x74] sm:$0xf]
    %v168 = vld [vmem:[#allocation10 + $0x78] sm:$0xf]
    %v169 = vld [vmem:[#allocation10 + $0x7c] sm:$0xf]
    %v170 = vld [vmem:[#allocation11] sm:$0x1]
    %v172 = vlaneseq
    %v173 = vshrl.u32 %v172, 7
    %v174 = vsub.s32 0, %v173
    %v175 = vrot.slane %v170, %v174
    %v181 = vunpack.c.l.b16 %v134
    %v182 = vunpack.c.h.b16 %v134
    %v183 = vunpack.c.l.b16 %v135
    %v184 = vunpack.c.h.b16 %v135
    %v185 = vunpack.c.l.b16 %v136
    %v186 = vunpack.c.h.b16 %v136
    %v187 = vunpack.c.l.b16 %v137
    %v188 = vunpack.c.h.b16 %v137
    %v189 = vpack.c.b16 %v183, %v181
    %v190 = vpack.c.b16 %v184, %v182
    %v191 = vpack.c.b16 %v187, %v185
    %v192 = vpack.c.b16 %v188, %v186
    %v229 = vunpack.c.l.b16 %v138
    %v230 = vunpack.c.l.b16 %v139
    %v231 = vunpack.c.l.b16 %v140
    %v232 = vunpack.c.l.b16 %v141
    %v233 = vunpack.c.l.b16 %v142
    %v234 = vunpack.c.l.b16 %v143
    %v235 = vunpack.c.l.b16 %v144
    %v236 = vunpack.c.l.b16 %v145
    %v237 = vunpack.c.l.b16 %v146
    %v238 = vunpack.c.l.b16 %v147
    %v239 = vunpack.c.l.b16 %v148
    %v240 = vunpack.c.l.b16 %v149
    %v241 = vunpack.c.l.b16 %v150
    %v242 = vunpack.c.l.b16 %v151
    %v243 = vunpack.c.l.b16 %v152
    %v244 = vunpack.c.l.b16 %v153
    %v245 = vunpack.c.l.b16 %v154
    %v246 = vunpack.c.l.b16 %v155
    %v247 = vunpack.c.l.b16 %v156
    %v248 = vunpack.c.l.b16 %v157
    %v249 = vunpack.c.l.b16 %v158
    %v250 = vunpack.c.l.b16 %v159
    %v251 = vunpack.c.l.b16 %v160
    %v252 = vunpack.c.l.b16 %v161
    %v253 = vunpack.c.l.b16 %v162
    %v254 = vunpack.c.l.b16 %v163
    %v255 = vunpack.c.l.b16 %v164
    %v256 = vunpack.c.l.b16 %v165
    %v257 = vunpack.c.l.b16 %v166
    %v258 = vunpack.c.l.b16 %v167
    %v259 = vunpack.c.l.b16 %v168
    %v260 = vunpack.c.l.b16 %v169
    %v261 = vpack.c.b16 %v230, %v229
    %v262 = vpack.c.b16 %v232, %v231
    %v263 = vpack.c.b16 %v234, %v233
    %v264 = vpack.c.b16 %v236, %v235
    %v265 = vpack.c.b16 %v238, %v237
    %v266 = vpack.c.b16 %v240, %v239
    %v267 = vpack.c.b16 %v242, %v241
    %v268 = vpack.c.b16 %v244, %v243
    %v269 = vpack.c.b16 %v246, %v245
    %v270 = vpack.c.b16 %v248, %v247
    %v271 = vpack.c.b16 %v250, %v249
    %v272 = vpack.c.b16 %v252, %v251
    %v273 = vpack.c.b16 %v254, %v253
    %v274 = vpack.c.b16 %v256, %v255
    %v275 = vpack.c.b16 %v258, %v257
    %v276 = vpack.c.b16 %v260, %v259
    %293 = vmatprep.subr.bf16.mxu0 0
    %294 = vmatpush1.bf16.msra.mxu0 %v261
    %295 = vmatprep.subr.bf16.mxu0 0
    %296 = vmatpush1.bf16.msra.mxu0 %v262
    %297 = vmatprep.subr.bf16.mxu0 0
    %298 = vmatpush1.bf16.msra.mxu0 %v263
    %299 = vmatprep.subr.bf16.mxu0 0
    %300 = vmatpush1.bf16.msra.mxu0 %v264
    %301 = vmatprep.subr.bf16.mxu0 0
    %302 = vmatpush1.bf16.msra.mxu0 %v265
    %303 = vmatprep.subr.bf16.mxu0 0
    %304 = vmatpush1.bf16.msra.mxu0 %v266
    %305 = vmatprep.subr.bf16.mxu0 0
    %306 = vmatpush1.bf16.msra.mxu0 %v267
    %307 = vmatprep.subr.bf16.mxu0 0
    %308 = vmatpush1.bf16.msra.mxu0 %v268
    %309 = vmatprep.subr.bf16.mxu0 0
    %310 = vmatpush1.bf16.msra.mxu0 %v269
    %311 = vmatprep.subr.bf16.mxu0 0
    %312 = vmatpush1.bf16.msra.mxu0 %v270
    %313 = vmatprep.subr.bf16.mxu0 0
    %314 = vmatpush1.bf16.msra.mxu0 %v271
    %315 = vmatprep.subr.bf16.mxu0 0
    %316 = vmatpush1.bf16.msra.mxu0 %v272
    %317 = vmatprep.subr.bf16.mxu0 0
    %318 = vmatpush1.bf16.msra.mxu0 %v273
    %319 = vmatprep.subr.bf16.mxu0 0
    %320 = vmatpush1.bf16.msra.mxu0 %v274
    %321 = vmatprep.subr.bf16.mxu0 0
    %322 = vmatpush1.bf16.msra.mxu0 %v275
    %323 = vmatprep.subr.bf16.mxu0 0
    %324 = vmatpush1.bf16.msra.mxu0 %v276
    %325 = vmatprep.mubr.bf16.mxu0 %v190
    %326 = vmatmul.mubr.bf16.gmra.mrb[0].mxu0 %v189
    %v327 = vpop.f32.mrb[0].mxu0
    %v328 = vadd.f32 %v175, %v327
    %v329 = vpop.f32.mrb[0].mxu0
    %v330 = vpop.f32.mrb[0].mxu0
    %v331 = vadd.f32 %v175, %v330
    %v332 = vpop.f32.mrb[0].mxu0
    %333 = vmatprep.mubr.bf16.mxu0 %v192
    %334 = vmatmul.mubr.bf16.gmra.mrb[0].mxu0 %v191
    %v335 = vpop.f32.mrb[0].mxu0
    %v336 = vadd.f32 %v175, %v335
    %v337 = vpop.f32.mrb[0].mxu0
    %v338 = vpop.f32.mrb[0].mxu0
    %v339 = vadd.f32 %v175, %v338
    %v340 = vpop.f32.mrb[0].mxu0
    %341 = vdwg.mxu0
    %v342 = vmax.f32 %v328, 0.0
    %v343 = vmax.f32 %v331, 0.0
    %v344 = vmax.f32 %v336, 0.0
    %v345 = vmax.f32 %v339, 0.0
    %v346 = vpack.c.bf16 %v343, %v342
    %v347 = vpack.c.bf16 %v345, %v344
    %v348 = vld [vmem:[%s8] sm:$0xf]
    %v349 = vld [vmem:[%s8 + $0x4] sm:$0xf]
    %v350 = vld [vmem:[%s8 + $0x8] sm:$0xf]
    %v351 = vld [vmem:[%s8 + $0xc] sm:$0xf]
    %v352 = vld [vmem:[%s8 + $0x10] sm:$0xf]
    %v353 = vld [vmem:[%s8 + $0x14] sm:$0xf]
    %v354 = vld [vmem:[%s8 + $0x18] sm:$0xf]
    %v355 = vld [vmem:[%s8 + $0x1c] sm:$0xf]
    %v356 = vld [vmem:[%s8 + $0x20] sm:$0xf]
    %v357 = vld [vmem:[%s8 + $0x24] sm:$0xf]
    %v358 = vld [vmem:[%s8 + $0x28] sm:$0xf]
    %v359 = vld [vmem:[%s8 + $0x2c] sm:$0xf]
    %v360 = vld [vmem:[%s8 + $0x30] sm:$0xf]
    %v361 = vld [vmem:[%s8 + $0x34] sm:$0xf]
    %v362 = vld [vmem:[%s8 + $0x38] sm:$0xf]
    %v363 = vld [vmem:[%s8 + $0x3c] sm:$0xf]
    %v364 = vld [vmem:[%s9] sm:$0x1]
    %v366 = vlaneseq
    %v367 = vshrl.u32 %v366, 7
    %v368 = vsub.s32 0, %v367
    %v369 = vrot.slane %v364, %v368
    %v387 = vunpack.c.l.b16 %v348
    %v388 = vunpack.c.l.b16 %v349
    %v389 = vunpack.c.l.b16 %v350
    %v390 = vunpack.c.l.b16 %v351
    %v391 = vunpack.c.l.b16 %v352
    %v392 = vunpack.c.l.b16 %v353
    %v393 = vunpack.c.l.b16 %v354
    %v394 = vunpack.c.l.b16 %v355
    %v395 = vunpack.c.l.b16 %v356
    %v396 = vunpack.c.l.b16 %v357
    %v397 = vunpack.c.l.b16 %v358
    %v398 = vunpack.c.l.b16 %v359
    %v399 = vunpack.c.l.b16 %v360
    %v400 = vunpack.c.l.b16 %v361
    %v401 = vunpack.c.l.b16 %v362
    %v402 = vunpack.c.l.b16 %v363
    %v403 = vpack.c.b16 %v388, %v387
    %v404 = vpack.c.b16 %v390, %v389
    %v405 = vpack.c.b16 %v392, %v391
    %v406 = vpack.c.b16 %v394, %v393
    %v407 = vpack.c.b16 %v396, %v395
    %v408 = vpack.c.b16 %v398, %v397
    %v409 = vpack.c.b16 %v400, %v399
    %v410 = vpack.c.b16 %v402, %v401
    %419 = vmatprep.subr.bf16.mxu0 0
    %420 = vmatpush1.bf16.msra.mxu0 %v403
    %421 = vmatprep.subr.bf16.mxu0 0
    %422 = vmatpush1.bf16.msra.mxu0 %v404
    %423 = vmatprep.subr.bf16.mxu0 0
    %424 = vmatpush1.bf16.msra.mxu0 %v405
    %425 = vmatprep.subr.bf16.mxu0 0
    %426 = vmatpush1.bf16.msra.mxu0 %v406
    %427 = vmatprep.subr.bf16.mxu0 0
    %428 = vmatpush1.bf16.msra.mxu0 %v407
    %429 = vmatprep.subr.bf16.mxu0 0
    %430 = vmatpush1.bf16.msra.mxu0 %v408
    %431 = vmatprep.subr.bf16.mxu0 0
    %432 = vmatpush1.bf16.msra.mxu0 %v409
    %433 = vmatprep.subr.bf16.mxu0 0
    %434 = vmatpush1.bf16.msra.mxu0 %v410
    %435 = vmatprep.subr.bf16.mxu0 0
    %436 = vmatpush1.bf16.msra.mxu0 0
    %437 = vmatprep.subr.bf16.mxu0 0
    %438 = vmatpush1.bf16.msra.mxu0 0
    %439 = vmatprep.subr.bf16.mxu0 0
    %440 = vmatpush1.bf16.msra.mxu0 0
    %441 = vmatprep.subr.bf16.mxu0 0
    %442 = vmatpush1.bf16.msra.mxu0 0
    %443 = vmatprep.subr.bf16.mxu0 0
    %444 = vmatpush1.bf16.msra.mxu0 0
    %445 = vmatprep.subr.bf16.mxu0 0
    %446 = vmatpush1.bf16.msra.mxu0 0
    %447 = vmatprep.subr.bf16.mxu0 0
    %448 = vmatpush1.bf16.msra.mxu0 0
    %449 = vmatprep.subr.bf16.mxu0 0
    %450 = vmatpush1.bf16.msra.mxu0 0
    %451 = vmatprep.mubr.bf16.mxu0 0
    %452 = vmatmul.mubr.bf16.gmra.mrb[0].mxu0 %v346
    %v453 = vpop.f32.mrb[0].mxu0
    %v454 = vadd.f32 %v369, %v453
    %v455 = vpop.f32.mrb[0].mxu0
    %v456 = vpop.f32.mrb[0].mxu0
    %v457 = vadd.f32 %v369, %v456
    %v458 = vpop.f32.mrb[0].mxu0
    %459 = vmatprep.mubr.bf16.mxu0 0
    %460 = vmatmul.mubr.bf16.gmra.mrb[0].mxu0 %v347
    %v461 = vpop.f32.mrb[0].mxu0
    %v462 = vadd.f32 %v369, %v461
    %v463 = vpop.f32.mrb[0].mxu0
    %v464 = vpop.f32.mrb[0].mxu0
    %v465 = vadd.f32 %v369, %v464
    %v466 = vpop.f32.mrb[0].mxu0
    %467 = vdwg.mxu0
    %v468 = vmax.f32 %v454, 0.0
    %v469 = vmax.f32 %v457, 0.0
    %v470 = vmax.f32 %v462, 0.0
    %v471 = vmax.f32 %v465, 0.0
    %v472 = vpack.c.bf16 %v469, %v468
    %v473 = vpack.c.bf16 %v471, %v470
    %v474 = vld [vmem:[#allocation13] sm:$0xf]
    %v475 = vld [vmem:[#allocation13 + $0x4] sm:$0xf]
    %v476 = vld [vmem:[#allocation13 + $0x8] sm:$0xf]
    %v477 = vld [vmem:[#allocation13 + $0xc] sm:$0xf]
    %v478 = vld [vmem:[#allocation13 + $0x10] sm:$0xf]
    %v479 = vld [vmem:[#allocation13 + $0x14] sm:$0xf]
    %v480 = vld [vmem:[#allocation13 + $0x18] sm:$0xf]
    %v481 = vld [vmem:[#allocation13 + $0x1c] sm:$0xf]
    %v482 = vld [vmem:[#allocation13 + $0x20] sm:$0xf]
    %v483 = vld [vmem:[#allocation13 + $0x24] sm:$0xf]
    %v484 = vld [vmem:[#allocation13 + $0x28] sm:$0xf]
    %v485 = vld [vmem:[#allocation13 + $0x2c] sm:$0xf]
    %v486 = vld [vmem:[#allocation13 + $0x30] sm:$0xf]
    %v487 = vld [vmem:[#allocation13 + $0x34] sm:$0xf]
    %v488 = vld [vmem:[#allocation13 + $0x38] sm:$0xf]
    %v489 = vld [vmem:[#allocation13 + $0x3c] sm:$0xf]
    %v490 = vld [vmem:[%s11] sm:$0x1]
    %v492 = vlaneseq
    %v493 = vshrl.u32 %v492, 7
    %v494 = vsub.s32 0, %v493
    %v495 = vrot.slane %v490, %v494
    %v513 = vunpack.c.l.b16 %v474
    %v514 = vunpack.c.l.b16 %v475
    %v515 = vunpack.c.l.b16 %v476
    %v516 = vunpack.c.l.b16 %v477
    %v517 = vunpack.c.l.b16 %v478
    %v518 = vunpack.c.l.b16 %v479
    %v519 = vunpack.c.l.b16 %v480
    %v520 = vunpack.c.l.b16 %v481
    %v521 = vunpack.c.l.b16 %v482
    %v522 = vunpack.c.l.b16 %v483
    %v523 = vunpack.c.l.b16 %v484
    %v524 = vunpack.c.l.b16 %v485
    %v525 = vunpack.c.l.b16 %v486
    %v526 = vunpack.c.l.b16 %v487
    %v527 = vunpack.c.l.b16 %v488
    %v528 = vunpack.c.l.b16 %v489
    %v529 = vpack.c.b16 %v514, %v513
    %v530 = vpack.c.b16 %v516, %v515
    %v531 = vpack.c.b16 %v518, %v517
    %v532 = vpack.c.b16 %v520, %v519
    %v533 = vpack.c.b16 %v522, %v521
    %v534 = vpack.c.b16 %v524, %v523
    %v535 = vpack.c.b16 %v526, %v525
    %v536 = vpack.c.b16 %v528, %v527
    %545 = vmatprep.subr.bf16.mxu0 0
    %546 = vmatpush1.bf16.msra.mxu0 %v529
    %547 = vmatprep.subr.bf16.mxu0 0
    %548 = vmatpush1.bf16.msra.mxu0 %v530
    %549 = vmatprep.subr.bf16.mxu0 0
    %550 = vmatpush1.bf16.msra.mxu0 %v531
    %551 = vmatprep.subr.bf16.mxu0 0
    %552 = vmatpush1.bf16.msra.mxu0 %v532
    %553 = vmatprep.subr.bf16.mxu0 0
    %554 = vmatpush1.bf16.msra.mxu0 %v533
    %555 = vmatprep.subr.bf16.mxu0 0
    %556 = vmatpush1.bf16.msra.mxu0 %v534
    %557 = vmatprep.subr.bf16.mxu0 0
    %558 = vmatpush1.bf16.msra.mxu0 %v535
    %559 = vmatprep.subr.bf16.mxu0 0
    %560 = vmatpush1.bf16.msra.mxu0 %v536
    %561 = vmatprep.subr.bf16.mxu0 0
    %562 = vmatpush1.bf16.msra.mxu0 0
    %563 = vmatprep.subr.bf16.mxu0 0
    %564 = vmatpush1.bf16.msra.mxu0 0
    %565 = vmatprep.subr.bf16.mxu0 0
    %566 = vmatpush1.bf16.msra.mxu0 0
    %567 = vmatprep.subr.bf16.mxu0 0
    %568 = vmatpush1.bf16.msra.mxu0 0
    %569 = vmatprep.subr.bf16.mxu0 0
    %570 = vmatpush1.bf16.msra.mxu0 0
    %571 = vmatprep.subr.bf16.mxu0 0
    %572 = vmatpush1.bf16.msra.mxu0 0
    %573 = vmatprep.subr.bf16.mxu0 0
    %574 = vmatpush1.bf16.msra.mxu0 0
    %575 = vmatprep.subr.bf16.mxu0 0
    %576 = vmatpush1.bf16.msra.mxu0 0
    %577 = vmatprep.mubr.bf16.mxu0 0
    %578 = vmatmul.mubr.bf16.gmra.mrb[0].mxu0 %v472
    %v579 = vpop.f32.mrb[0].mxu0
    %v580 = vadd.f32 %v495, %v579
    %v581 = vpop.f32.mrb[0].mxu0
    %v582 = vpop.f32.mrb[0].mxu0
    %v583 = vadd.f32 %v495, %v582
    %v584 = vpop.f32.mrb[0].mxu0
    %585 = vmatprep.mubr.bf16.mxu0 0
    %586 = vmatmul.mubr.bf16.gmra.mrb[0].mxu0 %v473
    %v587 = vpop.f32.mrb[0].mxu0
    %v588 = vadd.f32 %v495, %v587
    %v589 = vpop.f32.mrb[0].mxu0
    %v590 = vpop.f32.mrb[0].mxu0
    %v591 = vadd.f32 %v495, %v590
    %v592 = vpop.f32.mrb[0].mxu0
    %593 = vdwg.mxu0
    %v594 = vmul.f32 %v580, %v580
    %v595 = vmul.f32 %v583, %v583
    %v596 = vmul.f32 %v588, %v588
    %v597 = vmul.f32 %v591, %v591
    %598 = vadd.xlane.f32.xlu0 %v594
    %v599 = vpop.xlane.xlu0 %598
    %600 = vadd.xlane.f32.xlu0 %v595
    %v601 = vpop.xlane.xlu0 %600
    %602 = vadd.xlane.f32.xlu0 %v596
    %v603 = vpop.xlane.xlu0 %602
    %604 = vadd.xlane.f32.xlu0 %v597
    %v605 = vpop.xlane.xlu0 %604
    %v606 = vadd.f32 %v599, 1e-12
    %v607 = vadd.f32 %v601, 1e-12
    %v608 = vadd.f32 %v603, 1e-12
    %v609 = vadd.f32 %v605, 1e-12
    %v610 = vrsqrt.pop %v606
    %v611 = vrsqrt.pop %v607
    %v612 = vrsqrt.pop %v608
    %v613 = vrsqrt.pop %v609
    %v614 = vmul.f32 %v580, %v610
    %v615 = vmul.f32 %v583, %v611
    %v616 = vmul.f32 %v588, %v612
    %v617 = vmul.f32 %v591, %v613
    %v618 = vld [vmem:[%s4] sm:$0xff]
    %v619 = vld [vmem:[%s4 + $0x8] sm:$0xff]
    %v620 = vld [vmem:[#allocation8] sm:$0x1]
    %vm621 = vcmask 7168
    %v622 = vsel %vm621, %v618, 0.0
    %v623 = vsel %vm621, %v619, 0.0
    %v624 = vadd.f32 %v622, %v623
    %625 = vadd.xlane.f32.xlu0 %v624
    %v626 = vpop.xlane.xlu0 %625
    %v627 = vrot.slane %v626, 4
    %v628 = vadd.f32 %v626, %v627
    %v629 = vrot.slane %v628, 2
    %v630 = vadd.f32 %v628, %v629
    %v631 = vrot.slane %v630, 1
    %v632 = vadd.f32 %v630, %v631
    %s633 = vtos %v632
    %s634 = smax.f32 %s633, 1.0
    %v635 = vsub.f32 %v620, 1.0
    %v636 = vmul.f32 %v635, 1e+09
    %v637 = vmul.f32 %v614, %v616
    %v638 = vmul.f32 %v615, %v617
    %639 = vadd.xlane.f32.xlu0 %v637
    %v640 = vpop.xlane.xlu0 %639
    %641 = vadd.xlane.f32.xlu0 %v638
    %v642 = vpop.xlane.xlu0 %641
    %v643 = vmul.f32 %v640, 10.0
    %v644 = vmul.f32 %v642, 10.0
    %645 = vmatprep.subr.mxu0 0.0
    %646 = vmatpush1.xpose.msra.mxu0 %v616
    %647 = vmatprep.subr.mxu0 0.0
    %648 = vmatpush1.xpose.msra.mxu0 %v617
    %649 = vmatprep.subr.mxu0 0.0
    %650 = vmatpush1.xpose.msra.mxu0 0.0
    %651 = vmatprep.subr.mxu0 0.0
    %652 = vmatpush1.xpose.msra.mxu0 0.0
    %653 = vmatprep.subr.mxu0 0.0
    %654 = vmatpush1.xpose.msra.mxu0 0.0
    %655 = vmatprep.subr.mxu0 0.0
    %656 = vmatpush1.xpose.msra.mxu0 0.0
    %657 = vmatprep.subr.mxu0 0.0
    %658 = vmatpush1.xpose.msra.mxu0 0.0
    %659 = vmatprep.subr.mxu0 0.0
    %660 = vmatpush1.xpose.msra.mxu0 0.0
    %661 = vmatprep.subr.mxu0 0.0
    %662 = vmatpush1.xpose.msra.mxu0 0.0
    %663 = vmatprep.subr.mxu0 0.0
    %664 = vmatpush1.xpose.msra.mxu0 0.0
    %665 = vmatprep.subr.mxu0 0.0
    %666 = vmatpush1.xpose.msra.mxu0 0.0
    %667 = vmatprep.subr.mxu0 0.0
    %668 = vmatpush1.xpose.msra.mxu0 0.0
    %669 = vmatprep.subr.mxu0 0.0
    %670 = vmatpush1.xpose.msra.mxu0 0.0
    %671 = vmatprep.subr.mxu0 0.0
    %672 = vmatpush1.xpose.msra.mxu0 0.0
    %673 = vmatprep.subr.mxu0 0.0
    %674 = vmatpush1.xpose.msra.mxu0 0.0
    %675 = vmatprep.subr.mxu0 0.0
    %676 = vmatpush1.xpose.msra.mxu0 0.0
    %677 = vmatprep.subr.mxu0 0.0
    %678 = vmatpush1.xpose.msra.mxu0 0.0
    %679 = vmatprep.subr.mxu0 0.0
    %680 = vmatpush1.xpose.msra.mxu0 0.0
    %681 = vmatprep.subr.mxu0 0.0
    %682 = vmatpush1.xpose.msra.mxu0 0.0
    %683 = vmatprep.subr.mxu0 0.0
    %684 = vmatpush1.xpose.msra.mxu0 0.0
    %685 = vmatprep.subr.mxu0 0.0
    %686 = vmatpush1.xpose.msra.mxu0 0.0
    %687 = vmatprep.subr.mxu0 0.0
    %688 = vmatpush1.xpose.msra.mxu0 0.0
    %689 = vmatprep.subr.mxu0 0.0
    %690 = vmatpush1.xpose.msra.mxu0 0.0
    %691 = vmatprep.subr.mxu0 0.0
    %692 = vmatpush1.xpose.msra.mxu0 0.0
    %693 = vmatprep.subr.mxu0 0.0
    %694 = vmatpush1.xpose.msra.mxu0 0.0
    %695 = vmatprep.subr.mxu0 0.0
    %696 = vmatpush1.xpose.msra.mxu0 0.0
    %697 = vmatprep.subr.mxu0 0.0
    %698 = vmatpush1.xpose.msra.mxu0 0.0
    %699 = vmatprep.subr.mxu0 0.0
    %700 = vmatpush1.xpose.msra.mxu0 0.0
    %701 = vmatprep.subr.mxu0 0.0
    %702 = vmatpush1.xpose.msra.mxu0 0.0
    %703 = vmatprep.subr.mxu0 0.0
    %704 = vmatpush1.xpose.msra.mxu0 0.0
    %705 = vmatprep.subr.mxu0 0.0
    %706 = vmatpush1.xpose.msra.mxu0 0.0
    %707 = vmatprep.subr.mxu0 0.0
    %708 = vmatpush1.xpose.msra.mxu0 0.0
    %709 = vmatprep.mubr.f32.mxu0 0.0
    %710 = vmatmul.mubr.f32.gmra.mrb[0].mxu0 %v614
    %v711 = vpop.f32.mrb[0].mxu0
    %v712 = vadd.f32 0.0, %v711
    %v713 = vpop.f32.mrb[0].mxu0
    %714 = vmatprep.mubr.f32.mxu0 0.0
    %715 = vmatmul.mubr.f32.gmra.mrb[0].mxu0 %v615
    %v716 = vpop.f32.mrb[0].mxu0
    %v717 = vadd.f32 0.0, %v716
    %v718 = vpop.f32.mrb[0].mxu0
    %719 = vdwg.mxu0
    %v720 = vmul.f32 %v712, 10.0
    %v721 = vmul.f32 %v717, 10.0
    %v723 = vlaneseq
    %v724 = vshrl.u32 %v723, 7
    %v725 = vsub.s32 0, %v724
    %v726 = vrot.slane %v636, %v725
    %v728 = vadd.f32 %v720, %v726
    %v729 = vadd.f32 %v721, %v726
    %730 = vmatprep.subr.mxu0 0.0
    %731 = vmatpush1.xpose.msra.mxu0 %v614
    %732 = vmatprep.subr.mxu0 0.0
    %733 = vmatpush1.xpose.msra.mxu0 %v615
    %734 = vmatprep.subr.mxu0 0.0
    %735 = vmatpush1.xpose.msra.mxu0 0.0
    %736 = vmatprep.subr.mxu0 0.0
    %737 = vmatpush1.xpose.msra.mxu0 0.0
    %738 = vmatprep.subr.mxu0 0.0
    %739 = vmatpush1.xpose.msra.mxu0 0.0
    %740 = vmatprep.subr.mxu0 0.0
    %741 = vmatpush1.xpose.msra.mxu0 0.0
    %742 = vmatprep.subr.mxu0 0.0
    %743 = vmatpush1.xpose.msra.mxu0 0.0
    %744 = vmatprep.subr.mxu0 0.0
    %745 = vmatpush1.xpose.msra.mxu0 0.0
    %746 = vmatprep.subr.mxu0 0.0
    %747 = vmatpush1.xpose.msra.mxu0 0.0
    %748 = vmatprep.subr.mxu0 0.0
    %749 = vmatpush1.xpose.msra.mxu0 0.0
    %750 = vmatprep.subr.mxu0 0.0
    %751 = vmatpush1.xpose.msra.mxu0 0.0
    %752 = vmatprep.subr.mxu0 0.0
    %753 = vmatpush1.xpose.msra.mxu0 0.0
    %754 = vmatprep.subr.mxu0 0.0
    %755 = vmatpush1.xpose.msra.mxu0 0.0
    %756 = vmatprep.subr.mxu0 0.0
    %757 = vmatpush1.xpose.msra.mxu0 0.0
    %758 = vmatprep.subr.mxu0 0.0
    %759 = vmatpush1.xpose.msra.mxu0 0.0
    %760 = vmatprep.subr.mxu0 0.0
    %761 = vmatpush1.xpose.msra.mxu0 0.0
    %762 = vmatprep.subr.mxu0 0.0
    %763 = vmatpush1.xpose.msra.mxu0 0.0
    %764 = vmatprep.subr.mxu0 0.0
    %765 = vmatpush1.xpose.msra.mxu0 0.0
    %766 = vmatprep.subr.mxu0 0.0
    %767 = vmatpush1.xpose.msra.mxu0 0.0
    %768 = vmatprep.subr.mxu0 0.0
    %769 = vmatpush1.xpose.msra.mxu0 0.0
    %770 = vmatprep.subr.mxu0 0.0
    %771 = vmatpush1.xpose.msra.mxu0 0.0
    %772 = vmatprep.subr.mxu0 0.0
    %773 = vmatpush1.xpose.msra.mxu0 0.0
    %774 = vmatprep.subr.mxu0 0.0
    %775 = vmatpush1.xpose.msra.mxu0 0.0
    %776 = vmatprep.subr.mxu0 0.0
    %777 = vmatpush1.xpose.msra.mxu0 0.0
    %778 = vmatprep.subr.mxu0 0.0
    %779 = vmatpush1.xpose.msra.mxu0 0.0
    %780 = vmatprep.subr.mxu0 0.0
    %781 = vmatpush1.xpose.msra.mxu0 0.0
    %782 = vmatprep.subr.mxu0 0.0
    %783 = vmatpush1.xpose.msra.mxu0 0.0
    %784 = vmatprep.subr.mxu0 0.0
    %785 = vmatpush1.xpose.msra.mxu0 0.0
    %786 = vmatprep.subr.mxu0 0.0
    %787 = vmatpush1.xpose.msra.mxu0 0.0
    %788 = vmatprep.subr.mxu0 0.0
    %789 = vmatpush1.xpose.msra.mxu0 0.0
    %790 = vmatprep.subr.mxu0 0.0
    %791 = vmatpush1.xpose.msra.mxu0 0.0
    %792 = vmatprep.subr.mxu0 0.0
    %793 = vmatpush1.xpose.msra.mxu0 0.0
    %794 = vmatprep.mubr.f32.mxu0 0.0
    %795 = vmatmul.mubr.f32.gmra.mrb[0].mxu0 %v616
    %v796 = vpop.f32.mrb[0].mxu0
    %v797 = vadd.f32 0.0, %v796
    %v798 = vpop.f32.mrb[0].mxu0
    %799 = vmatprep.mubr.f32.mxu0 0.0
    %800 = vmatmul.mubr.f32.gmra.mrb[0].mxu0 %v617
    %v801 = vpop.f32.mrb[0].mxu0
    %v802 = vadd.f32 0.0, %v801
    %v803 = vpop.f32.mrb[0].mxu0
    %804 = vdwg.mxu0
    %v805 = vmul.f32 %v797, 10.0
    %v806 = vmul.f32 %v802, 10.0
    %v807 = vadd.f32 %v805, %v726
    %v808 = vadd.f32 %v806, %v726
    %vm809 = vcmask 130048
    %v810 = vsel %vm809, %v728, -inf
    %811 = vmax.xlane.f32.xlu0 %v810
    %v812 = vpop.xlane.xlu0 %811
    %v813 = vsel %vm809, %v729, -inf
    %814 = vmax.xlane.f32.xlu0 %v813
    %v815 = vpop.xlane.xlu0 %814
    %v816 = vsub.f32 %v728, %v812
    %v817 = vsub.f32 %v729, %v815
    %v818 = vmul.f32 %v816, 1.442695
    %v819 = vpow.pop %v818
    %v820 = vmul.f32 %v817, 1.442695
    %v821 = vpow.pop %v820
    %v822 = vsel %vm809, %v819, 0.0
    %823 = vadd.xlane.f32.xlu0 %v822
    %v824 = vpop.xlane.xlu0 %823
    %v825 = vsel %vm809, %v821, 0.0
    %826 = vadd.xlane.f32.xlu0 %v825
    %v827 = vpop.xlane.xlu0 %826
    %v828 = vlog2.pop %v824
    %v829 = vmul.f32 %v828, 0.6931472
    %v830 = vlog2.pop %v827
    %v831 = vmul.f32 %v830, 0.6931472
    %v832 = vadd.f32 %v829, %v812
    %v833 = vadd.f32 %v831, %v815
    %v834 = vsub.f32 %v832, %v643
    %v835 = vsub.f32 %v833, %v644
    %v836 = vmul.f32 %v834, %v618
    %v837 = vmul.f32 %v835, %v619
    %v838 = vsel %vm621, %v836, 0.0
    %v839 = vsel %vm621, %v837, 0.0
    %v840 = vadd.f32 %v838, %v839
    %841 = vadd.xlane.f32.xlu0 %v840
    %v842 = vpop.xlane.xlu0 %841
    %v843 = vrot.slane %v842, 4
    %v844 = vadd.f32 %v842, %v843
    %v845 = vrot.slane %v844, 2
    %v846 = vadd.f32 %v844, %v845
    %v847 = vrot.slane %v846, 1
    %v848 = vadd.f32 %v846, %v847
    %s849 = vtos %v848
    %v850 = vstv %s634
    %v851 = vrcp.pop %v850
    %s852 = vtos %v851
    %s853 = smul.f32 %s849, %s852
    %v854 = vsel %vm809, %v807, -inf
    %855 = vmax.xlane.f32.xlu0 %v854
    %v856 = vpop.xlane.xlu0 %855
    %v857 = vsel %vm809, %v808, -inf
    %858 = vmax.xlane.f32.xlu0 %v857
    %v859 = vpop.xlane.xlu0 %858
    %v860 = vsub.f32 %v807, %v856
    %v861 = vsub.f32 %v808, %v859
    %v862 = vmul.f32 %v860, 1.442695
    %v863 = vpow.pop %v862
    %v864 = vmul.f32 %v861, 1.442695
    %v865 = vpow.pop %v864
    %v866 = vsel %vm809, %v863, 0.0
    %867 = vadd.xlane.f32.xlu0 %v866
    %v868 = vpop.xlane.xlu0 %867
    %v869 = vsel %vm809, %v865, 0.0
    %870 = vadd.xlane.f32.xlu0 %v869
    %v871 = vpop.xlane.xlu0 %870
    %v872 = vlog2.pop %v868
    %v873 = vmul.f32 %v872, 0.6931472
    %v874 = vlog2.pop %v871
    %v875 = vmul.f32 %v874, 0.6931472
    %v876 = vadd.f32 %v873, %v856
    %v877 = vadd.f32 %v875, %v859
    %v878 = vsub.f32 %v876, %v643
    %v879 = vsub.f32 %v877, %v644
    %v880 = vmul.f32 %v878, %v618
    %v881 = vmul.f32 %v879, %v619
    %v882 = vsel %vm621, %v880, 0.0
    %v883 = vsel %vm621, %v881, 0.0
    %v884 = vadd.f32 %v882, %v883
    %885 = vadd.xlane.f32.xlu0 %v884
    %v886 = vpop.xlane.xlu0 %885
    %v887 = vrot.slane %v886, 4
    %v888 = vadd.f32 %v886, %v887
    %v889 = vrot.slane %v888, 2
    %v890 = vadd.f32 %v888, %v889
    %v891 = vrot.slane %v890, 1
    %v892 = vadd.f32 %v890, %v891
    %s893 = vtos %v892
    %v894 = vstv %s634
    %v895 = vrcp.pop %v894
    %s896 = vtos %v895
    %s897 = smul.f32 %s893, %s896
    %s898 = sadd.f32 %s853, %s897
    %s899 = smul.f32 %s898, 0.5
    %v900 = vld [vmem:[%s3] sm:$0xff]
    %v901 = vld [vmem:[%s3 + $0x8] sm:$0xff]
    %v902 = vsel %vm621, %v900, 0.0
    %v903 = vsel %vm621, %v901, 0.0
    %v904 = vadd.f32 %v902, %v903
    %905 = vadd.xlane.f32.xlu0 %v904
    %v906 = vpop.xlane.xlu0 %905
    %v907 = vrot.slane %v906, 4
    %v908 = vadd.f32 %v906, %v907
    %v909 = vrot.slane %v908, 2
    %v910 = vadd.f32 %v908, %v909
    %v911 = vrot.slane %v910, 1
    %v912 = vadd.f32 %v910, %v911
    %s913 = vtos %v912
    %s914 = smax.f32 %s913, 1.0
    %v915 = vld [vmem:[#allocation5] sm:$0xff]
    %v916 = vld [vmem:[#allocation5 + $0x8] sm:$0xff]
    %v917 = vsub.f32 %v614, %v915
    %v918 = vsub.f32 %v615, %v916
    %v919 = vmul.f32 %v917, %v917
    %v920 = vmul.f32 %v918, %v918
    %921 = vadd.xlane.f32.xlu0 %v919
    %v922 = vpop.xlane.xlu0 %921
    %923 = vadd.xlane.f32.xlu0 %v920
    %v924 = vpop.xlane.xlu0 %923
    %v925 = vld [vmem:[#allocation7] sm:$0xff]
    %v926 = vld [vmem:[#allocation7 + $0x8] sm:$0xff]
    %v927 = vsub.f32 %v616, %v925
    %v928 = vsub.f32 %v617, %v926
    %v929 = vmul.f32 %v927, %v927
    %v930 = vmul.f32 %v928, %v928
    %931 = vadd.xlane.f32.xlu0 %v929
    %v932 = vpop.xlane.xlu0 %931
    %933 = vadd.xlane.f32.xlu0 %v930
    %v934 = vpop.xlane.xlu0 %933
    %v935 = vadd.f32 %v922, %v932
    %v936 = vadd.f32 %v924, %v934
    %v937 = vmul.f32 %v935, %v900
    %v938 = vmul.f32 %v936, %v901
    %v939 = vsel %vm621, %v937, 0.0
    %v940 = vsel %vm621, %v938, 0.0
    %v941 = vadd.f32 %v939, %v940
    %942 = vadd.xlane.f32.xlu0 %v941
    %v943 = vpop.xlane.xlu0 %942
    %v944 = vrot.slane %v943, 4
    %v945 = vadd.f32 %v943, %v944
    %v946 = vrot.slane %v945, 2
    %v947 = vadd.f32 %v945, %v946
    %v948 = vrot.slane %v947, 1
    %v949 = vadd.f32 %v947, %v948
    %s950 = vtos %v949
    %s951 = smul.f32 %s914, 2.0
    %v952 = vstv %s951
    %v953 = vrcp.pop %v952
    %s954 = vtos %v953
    %s955 = smul.f32 %s950, %s954
    %s956 = smul.f32 %s955, 0.5
    %s957 = sadd.f32 %s899, %s956
    %v958 = vstv %s957
    %vm959 = vcmask 0
    %960 = vst.msk [vmem:[#allocation14] sm:$0x1] %vm959, %v958
    // Predicated region
    $region78: #{tpu_custom_call.1} parent=1 // pred_check
      _
    $region79: #{tpu_custom_call.1} parent=1 // pred_check_branch
      %962 = sbr.rel (0) target = $region81
    $region80: #{tpu_custom_call.1} parent=1 // pred_region
      %s964 = ssub.s32 16, 16
      %965 = vsyncadd [#allocation4], %s964
      %s967 = sshll.u32 [#allocation14], 4
      %s968 = int_to_ptr.vmem [resolvable:$true] %s967
      %970 = dma.vmem_to_hbm [thread:$0]  %s968, 16, %s12, [#allocation4]
    $region81: #{tpu_custom_call.1} parent=1 // pred_fallthru
      _
    // Predicated region
    $region82: #{tpu_custom_call.1} parent=1 // pred_check
      _
    $region83: #{tpu_custom_call.1} parent=1 // pred_check_branch
      %972 = sbr.rel (0) target = $region85
    $region84: #{tpu_custom_call.1} parent=1 // pred_region
      %973 = dma.done [#allocation4], 16
    $region85: #{tpu_custom_call.1} parent=1 // pred_fallthru
      _
    %974 = vsyncpa [#allocation3], 1
    %975 = vsyncpa [#allocation6], 1
    %976 = vsyncpa [#allocation9], 1
    %977 = vsyncpa [#allocation12], 1
    %978 = vsyncpa [#allocation4], 1

</llo_original>
